<compile_context>
chip_gen: v7x
topology: tpu7x:2x2x1
jax: 0.10.0
libtpu: 0.0.40
codegen_flags: <defaults>
</compile_context>

<pallas_src>
import functools

import jax
import jax.numpy as jnp
from jax.experimental import pallas as pl
from jax.experimental.pallas import tpu as pltpu

VOCAB = 21          # len(residue_constants.restypes_with_x)
LN_EPS = 1e-5       # torch.nn.LayerNorm default eps
_LANES = 128        # TPU lane width; the vocab axis is padded up to a multiple
_SUB = 16           # bf16 sublane packing; row blocks kept multiples of this


def _round_up(x, n):
  return ((x + n - 1) // n) * n


def _num_tensorcores():
  """2 on v7x (two TensorCores/chip), 1 on v5e/v6e; 1 if undetectable."""
  try:
    kind = jax.devices()[0].device_kind.lower()
  except Exception:  # pragma: no cover - defensive, never expected on TPU
    return 1
  return 2 if ("v7" in kind or "7x" in kind) else 1


def _gelu_tanh(x):
  # tanh-form GELU: 0.5*x*(1 + tanh(sqrt(2/pi)*(x + 0.044715*x^3))).
  # Max abs deviation from the exact (erf) GELU is ~5e-4, far inside the head
  # tolerance; tanh lowers to the EUP slot so the VALU cost is ~7 ops/elem.
  return 0.5 * x * (1.0 + jnp.tanh(
      0.7978845608028654 * (x + 0.044715 * x * x * x)))


def _lm_head_kernel(x_ref, w1_ref, b1_ref, w2_ref, b2_ref, o_ref):
  # Cast the f32 rows to bf16 on the VPU (hidden under the MXU); the wrapper
  # no longer pre-casts, halving HBM traffic for x.
  x = x_ref[...].astype(jnp.bfloat16)

  # Linear(dim, dim): bf16 MXU operands, f32 accumulation.
  h = jnp.dot(x, w1_ref[...], preferred_element_type=jnp.float32)
  h = h + b1_ref[...]

  # GELU (tanh form) in f32 on the VPU/EUP.
  h = _gelu_tanh(h)

  # LayerNorm(dim) statistics in f32, centered variance (robust to large row
  # means).  The affine (gamma, beta) is folded into w2/b2 by the wrapper.
  mu = jnp.mean(h, axis=-1, keepdims=True)
  d = h - mu
  var = jnp.mean(d * d, axis=-1, keepdims=True)
  hn = d * jax.lax.rsqrt(var + LN_EPS)

  # Linear(dim, vocab), vocab axis lane-padded to a multiple of 128.
  out = jnp.dot(hn.astype(w2_ref.dtype), w2_ref[...],
                preferred_element_type=jnp.float32) + b2_ref[...]
  o_ref[...] = out.astype(o_ref.dtype)


def _resident_spec(shape):
  """BlockSpec for a grid-invariant (weight/bias) operand: single-buffered.

  The index_map is constant so the operand is never re-fetched; Buffered(1)
  halves its VMEM footprint vs. the default double buffering.  Falls back to a
  plain spec on JAX versions whose BlockSpec lacks `pipeline_mode`.
  """
  idx = lambda i: (0,) * len(shape)
  try:
    return pl.BlockSpec(shape, idx, pipeline_mode=pl.Buffered(1))
  except TypeError:
    return pl.BlockSpec(shape, idx)


@functools.partial(jax.jit, static_argnames=("block_rows",))
def roberta_lm_head(single, params, *, block_rows=512):
  """single: (batch, seq, dim) -> logits: (batch, seq, VOCAB)."""
  b, s, dim = single.shape
  w1, b1 = params["w1"], params["b1"]
  gamma, beta = params["gamma"], params["beta"]
  w2, b2 = params["w2"], params["b2"]
  vocab = w2.shape[1]
  out_dtype = single.dtype

  # ---- parameter prep (cheap, done by XLA outside the kernel) -------------
  # Fold the LayerNorm affine into the second linear:
  #   (hn*gamma + beta) @ w2 + b2 == hn @ (gamma[:,None]*w2) + (beta @ w2 + b2)
  w2f = gamma.astype(jnp.float32)[:, None] * w2.astype(jnp.float32)
  b2f = beta.astype(jnp.float32) @ w2.astype(jnp.float32) + b2.astype(jnp.float32)
  # Lane-pad the vocab axis so output stores are dense (no vst.msk).
  lanes = _round_up(vocab, _LANES)
  w2p = jnp.zeros((dim, lanes), jnp.bfloat16).at[:, :vocab].set(
      w2f.astype(jnp.bfloat16))
  b2p = jnp.zeros((1, lanes), jnp.float32).at[:, :vocab].set(b2f)
  # bf16 MXU weight (x is cast to bf16 inside the kernel; f32 accumulation).
  w1b = w1.astype(jnp.bfloat16)
  b1f = b1.astype(jnp.float32).reshape(1, dim)

  # ---- row tiling ----------------------------------------------------------
  m = b * s
  x2d = single.reshape(m, dim)          # stays f32; kernel casts on the VPU
  rows = _round_up(m, _SUB)
  br = min(block_rows, rows)
  # v7x: two TensorCores share the "parallel" row axis -- give each core >= 2
  # blocks so both pipelines stay busy.  Single-TC v5e/v6e keep one big block.
  n_cores = _num_tensorcores()
  if n_cores > 1:
    min_blocks = 2 * n_cores
    if rows > _SUB * min_blocks and pl.cdiv(rows, br) < min_blocks:
      br = _round_up(pl.cdiv(rows, min_blocks), _SUB)
  m_pad = _round_up(rows, br)
  if m_pad != m:
    x2d = jnp.pad(x2d, ((0, m_pad - m), (0, 0)))
  grid = (m_pad // br,)

  out = pl.pallas_call(
      _lm_head_kernel,
      out_shape=jax.ShapeDtypeStruct((m_pad, lanes), out_dtype),
      grid_spec=pltpu.PrefetchScalarGridSpec(
          num_scalar_prefetch=0,
          grid=grid,
          in_specs=[
              pl.BlockSpec((br, dim), lambda i: (i, 0)),  # x rows (f32)
              _resident_spec((dim, dim)),                 # w1 (bf16, resident)
              _resident_spec((1, dim)),                   # b1 (f32, resident)
              _resident_spec((dim, lanes)),               # folded w2 (bf16)
              _resident_spec((1, lanes)),                 # folded b2 (f32)
          ],
          out_specs=pl.BlockSpec((br, lanes), lambda i: (i, 0)),
      ),
      compiler_params=pltpu.CompilerParams(
          dimension_semantics=("parallel",),
          vmem_limit_bytes=48 * 1024 * 1024),
  )(x2d, w1b, b1f, w2p, b2p)

  return out[:m, :vocab].reshape(b, s, vocab)


def _reference(single, params):
  """Plain-JAX reference: the module's math (exact erf GELU, un-folded
  LayerNorm affine), with the same bf16-operand / f32-accumulation matmuls as
  the kernel so the comparison isolates kernel correctness from bf16 rounding."""
  x = single.astype(jnp.bfloat16)
  h = jnp.dot(x, params["w1"].astype(jnp.bfloat16),
              preferred_element_type=jnp.float32) + params["b1"]
  h = 0.5 * h * (1.0 + jax.scipy.special.erf(h * 0.7071067811865476))
  mu = jnp.mean(h, axis=-1, keepdims=True)
  var = jnp.mean((h - mu) ** 2, axis=-1, keepdims=True)
  hn = (h - mu) * jax.lax.rsqrt(var + LN_EPS)
  hn = hn * params["gamma"] + params["beta"]
  out = jnp.dot(hn.astype(jnp.bfloat16), params["w2"].astype(jnp.bfloat16),
                preferred_element_type=jnp.float32) + params["b2"]
  return out.astype(single.dtype)


def _init_params(key, dim, vocab):
  k1, k2, k3, k4, k5, k6 = jax.random.split(key, 6)
  bound = 1.0 / jnp.sqrt(dim)
  return {
      # nn.Linear(dim, dim): torch stores (out,in); we keep (in,out) for x @ W.
      "w1": jax.random.uniform(k1, (dim, dim), jnp.float32, -bound, bound),
      "b1": jax.random.uniform(k2, (dim,), jnp.float32, -bound, bound),
      # nn.LayerNorm(dim): torch initializes weight=1, bias=0; use non-trivial
      # values here so the wrapper's affine fold is actually exercised.
      "gamma": 1.0 + 0.1 * jax.random.normal(k5, (dim,), jnp.float32),
      "beta": 0.1 * jax.random.normal(k6, (dim,), jnp.float32),
      # nn.Linear(dim, vocab)
      "w2": jax.random.uniform(k3, (dim, vocab), jnp.float32, -bound, bound),
      "b2": jax.random.uniform(k4, (vocab,), jnp.float32, -bound, bound),
  }


if __name__ == "__main__":
  key = jax.random.PRNGKey(0)
  k_x, k_p = jax.random.split(key)

  batch, seq, dim = 2, 8, 32
  single = jax.random.normal(k_x, (batch, seq, dim), jnp.float32)
  params = _init_params(k_p, dim, VOCAB)

  logits = roberta_lm_head(single, params)
  jax.block_until_ready(logits)

  assert logits.shape == (batch, seq, VOCAB), logits.shape
  ref = _reference(single, params)
  # Dominant error source is bf16 MXU rounding (shared with the reference);
  # remaining slack covers the tanh-GELU approximation (<~5e-4) and the
  # bf16-folded LayerNorm affine.
  assert jnp.allclose(logits, ref, atol=5e-2, rtol=5e-2), (
      float(jnp.max(jnp.abs(logits - ref))))

  print("KERNEL_OK")
</pallas_src>

<mosaic_0001>
module attributes {stable_mosaic.version = 11 : i64} {
  func.func @_lm_head_kernel(%arg0: i32, %arg1: memref<16x32xf32, #tpu.memory_space<vmem>>, %arg2: memref<32x32xbf16, #tpu.memory_space<vmem>>, %arg3: memref<1x32xf32, #tpu.memory_space<vmem>>, %arg4: memref<32x128xbf16, #tpu.memory_space<vmem>>, %arg5: memref<1x128xf32, #tpu.memory_space<vmem>>, %arg6: memref<16x128xf32, #tpu.memory_space<vmem>>) attributes {dimension_semantics = [#tpu.dimension_semantics<parallel>], iteration_bounds = array<i64: 1>, scalar_prefetch = 0 : i64, scratch_operands = 0 : i64, tpu.core_type = #tpu.core_type<tc>, window_params = [{transform_indices = @transform_0, window_bounds = array<i64: 16, 32>}, {pipeline_mode = #tpu.pipeline_mode<synchronous>, transform_indices = @transform_1, window_bounds = array<i64: 32, 32>}, {pipeline_mode = #tpu.pipeline_mode<synchronous>, transform_indices = @transform_2, window_bounds = array<i64: 1, 32>}, {pipeline_mode = #tpu.pipeline_mode<synchronous>, transform_indices = @transform_3, window_bounds = array<i64: 32, 128>}, {pipeline_mode = #tpu.pipeline_mode<synchronous>, transform_indices = @transform_4, window_bounds = array<i64: 1, 128>}, {transform_indices = @transform_5, window_bounds = array<i64: 16, 128>}]} {
    %c0 = arith.constant 0 : index
    %c0_0 = arith.constant 0 : index
    %0 = vector.load %arg1[%c0, %c0_0] : memref<16x32xf32, #tpu.memory_space<vmem>>, vector<16x32xf32>
    %1 = arith.truncf %0 : vector<16x32xf32> to vector<16x32xbf16>
    %c0_1 = arith.constant 0 : index
    %c0_2 = arith.constant 0 : index
    %2 = vector.load %arg2[%c0_1, %c0_2] : memref<32x32xbf16, #tpu.memory_space<vmem>>, vector<32x32xbf16>
    %cst = arith.constant dense<0.000000e+00> : vector<16x32xf32>
    %3 = tpu.matmul %1, %2, %cst {dimension_numbers = #tpu.dot_dimension_numbers<[1], [0], [0], [1], [0, 0, 1, 1], [], []>} : vector<16x32xbf16>, vector<32x32xbf16>, vector<16x32xf32> -> vector<16x32xf32>
    %c0_3 = arith.constant 0 : index
    %c0_4 = arith.constant 0 : index
    %4 = vector.load %arg3[%c0_3, %c0_4] : memref<1x32xf32, #tpu.memory_space<vmem>>, vector<1x32xf32>
    %5 = vector.broadcast %4 : vector<1x32xf32> to vector<16x32xf32>
    %6 = arith.addf %3, %5 : vector<16x32xf32>
    %cst_5 = arith.constant 5.000000e-01 : f32
    %7 = vector.broadcast %cst_5 : f32 to vector<16x32xf32>
    %8 = arith.mulf %7, %6 : vector<16x32xf32>
    %cst_6 = arith.constant 4.471500e-02 : f32
    %9 = vector.broadcast %cst_6 : f32 to vector<16x32xf32>
    %10 = arith.mulf %9, %6 : vector<16x32xf32>
    %11 = arith.mulf %10, %6 : vector<16x32xf32>
    %12 = arith.mulf %11, %6 : vector<16x32xf32>
    %13 = arith.addf %6, %12 : vector<16x32xf32>
    %cst_7 = arith.constant 0.797884583 : f32
    %14 = vector.broadcast %cst_7 : f32 to vector<16x32xf32>
    %15 = arith.mulf %14, %13 : vector<16x32xf32>
    %16 = math.tanh %15 : vector<16x32xf32>
    %cst_8 = arith.constant 1.000000e+00 : f32
    %17 = vector.broadcast %cst_8 : f32 to vector<16x32xf32>
    %18 = arith.addf %17, %16 : vector<16x32xf32>
    %19 = arith.mulf %8, %18 : vector<16x32xf32>
    %cst_9 = arith.constant dense<0.000000e+00> : vector<16xf32>
    %20 = vector.multi_reduction <add>, %19, %cst_9 [1] : vector<16x32xf32> to vector<16xf32>
    %21 = vector.shape_cast %20 : vector<16xf32> to vector<16x1xf32>
    %cst_10 = arith.constant 3.200000e+01 : f32
    %22 = vector.broadcast %cst_10 : f32 to vector<16x1xf32>
    %23 = arith.divf %21, %22 : vector<16x1xf32>
    %24 = vector.broadcast %23 : vector<16x1xf32> to vector<16x32xf32>
    %25 = arith.subf %19, %24 : vector<16x32xf32>
    %26 = arith.mulf %25, %25 : vector<16x32xf32>
    %cst_11 = arith.constant dense<0.000000e+00> : vector<16xf32>
    %27 = vector.multi_reduction <add>, %26, %cst_11 [1] : vector<16x32xf32> to vector<16xf32>
    %28 = vector.shape_cast %27 : vector<16xf32> to vector<16x1xf32>
    %cst_12 = arith.constant 3.200000e+01 : f32
    %29 = vector.broadcast %cst_12 : f32 to vector<16x1xf32>
    %30 = arith.divf %28, %29 : vector<16x1xf32>
    %cst_13 = arith.constant 9.99999974E-6 : f32
    %31 = vector.broadcast %cst_13 : f32 to vector<16x1xf32>
    %32 = arith.addf %30, %31 : vector<16x1xf32>
    %33 = math.rsqrt %32 : vector<16x1xf32>
    %34 = vector.broadcast %33 : vector<16x1xf32> to vector<16x32xf32>
    %35 = arith.mulf %25, %34 : vector<16x32xf32>
    %36 = arith.truncf %35 : vector<16x32xf32> to vector<16x32xbf16>
    %c0_14 = arith.constant 0 : index
    %c0_15 = arith.constant 0 : index
    %37 = vector.load %arg4[%c0_14, %c0_15] : memref<32x128xbf16, #tpu.memory_space<vmem>>, vector<32x128xbf16>
    %cst_16 = arith.constant dense<0.000000e+00> : vector<16x128xf32>
    %38 = tpu.matmul %36, %37, %cst_16 {dimension_numbers = #tpu.dot_dimension_numbers<[1], [0], [0], [1], [0, 0, 1, 1], [], []>} : vector<16x32xbf16>, vector<32x128xbf16>, vector<16x128xf32> -> vector<16x128xf32>
    %c0_17 = arith.constant 0 : index
    %c0_18 = arith.constant 0 : index
    %39 = vector.load %arg5[%c0_17, %c0_18] : memref<1x128xf32, #tpu.memory_space<vmem>>, vector<1x128xf32>
    %40 = vector.broadcast %39 : vector<1x128xf32> to vector<16x128xf32>
    %41 = arith.addf %38, %40 : vector<16x128xf32>
    %c0_19 = arith.constant 0 : index
    %c0_20 = arith.constant 0 : index
    %42 = vector.load %arg6[%c0_19, %c0_20] : memref<16x128xf32, #tpu.memory_space<vmem>>, vector<16x128xf32>
    tpu.vector_store %arg6[%c0_19, %c0_20], %41 {strides = array<i32>} : memref<16x128xf32, #tpu.memory_space<vmem>>, vector<16x128xf32>,
    return
  }
  func.func @transform_0(%arg0: i32) -> (i32, i32) {
    %c0_i32 = arith.constant 0 : i32
    %c0_i32_0 = arith.constant 0 : i32
    return %arg0, %c0_i32 : i32, i32
  }
  func.func @transform_1(%arg0: i32) -> (i32, i32) {
    %c0_i32 = arith.constant 0 : i32
    %c0_i32_0 = arith.constant 0 : i32
    %c0_i32_1 = arith.constant 0 : i32
    return %c0_i32, %c0_i32_0 : i32, i32
  }
  func.func @transform_2(%arg0: i32) -> (i32, i32) {
    %c0_i32 = arith.constant 0 : i32
    %c0_i32_0 = arith.constant 0 : i32
    %c0_i32_1 = arith.constant 0 : i32
    return %c0_i32, %c0_i32_0 : i32, i32
  }
  func.func @transform_3(%arg0: i32) -> (i32, i32) {
    %c0_i32 = arith.constant 0 : i32
    %c0_i32_0 = arith.constant 0 : i32
    %c0_i32_1 = arith.constant 0 : i32
    return %c0_i32, %c0_i32_0 : i32, i32
  }
  func.func @transform_4(%arg0: i32) -> (i32, i32) {
    %c0_i32 = arith.constant 0 : i32
    %c0_i32_0 = arith.constant 0 : i32
    %c0_i32_1 = arith.constant 0 : i32
    return %c0_i32, %c0_i32_0 : i32, i32
  }
  func.func @transform_5(%arg0: i32) -> (i32, i32) {
    %c0_i32 = arith.constant 0 : i32
    %c0_i32_0 = arith.constant 0 : i32
    return %arg0, %c0_i32 : i32, i32
  }
}

</mosaic_0001>

<llo_original>
// kernel: roberta_lm_head.1
$region0: #{roberta_lm_head.1}
  #allocation0 [shape = 'u32[]', space=smem, size = 0x4, offset = 0x4, fixed_abs, tag = 'smem constant byte address 0x4 - core index']
  #allocation1 [shape = 'u32[144,128]{1,0:T(1,128)}', space=vmem, size = 0x12000, scoped, tag = 'internal scratch']
  %s0 = inlined_call_operand.vmem [shape: f32[16,32], index: 0, kind: input, shape index: {}]
  %s1 = inlined_call_operand.vmem [shape: bf16[32,32], index: 1, kind: input, shape index: {}]
  %s2 = inlined_call_operand.vmem [shape: f32[1,32], index: 2, kind: input, shape index: {}]
  %s3 = inlined_call_operand.vmem [shape: bf16[32,128], index: 3, kind: input, shape index: {}]
  %s4 = inlined_call_operand.vmem [shape: f32[1,128], index: 4, kind: input, shape index: {}]
  %s5 = inlined_call_operand.vmem [shape: f32[16,128], index: 5, kind: output, shape index: {}]
  %s6 = sld [smem:[#allocation0]]
  $region30: #{roberta_lm_head.1} parent=0
    _
  %s8 = ssub.s32 1, %s6
  %s9 = scalar_select 0, %s8, %s6
  // Predicated region
  $region2: #{roberta_lm_head.1} parent=0 // pred_check
    _
  $region3: #{roberta_lm_head.1} parent=0 // pred_check_branch
    %11 = sbr.rel (0) target = $region5
  $region4: #{roberta_lm_head.1} parent=0 // pred_region
    _
  $region5: #{roberta_lm_head.1} parent=0 // pred_fallthru
    _
  // Predicated region
  $region6: #{roberta_lm_head.1} parent=0 // pred_check
    _
  $region7: #{roberta_lm_head.1} parent=0 // pred_check_branch
    %13 = sbr.rel (0) target = $region9
  $region8: #{roberta_lm_head.1} parent=0 // pred_region
    _
  $region9: #{roberta_lm_head.1} parent=0 // pred_fallthru
    _
  // Predicated region
  $region10: #{roberta_lm_head.1} parent=0 // pred_check
    _
  $region11: #{roberta_lm_head.1} parent=0 // pred_check_branch
    %15 = sbr.rel (0) target = $region13
  $region12: #{roberta_lm_head.1} parent=0 // pred_region
    _
  $region13: #{roberta_lm_head.1} parent=0 // pred_fallthru
    _
  // Predicated region
  $region14: #{roberta_lm_head.1} parent=0 // pred_check
    _
  $region15: #{roberta_lm_head.1} parent=0 // pred_check_branch
    %17 = sbr.rel (0) target = $region17
  $region16: #{roberta_lm_head.1} parent=0 // pred_region
    _
  $region17: #{roberta_lm_head.1} parent=0 // pred_fallthru
    _
  // Predicated region
  $region18: #{roberta_lm_head.1} parent=0 // pred_check
    _
  $region19: #{roberta_lm_head.1} parent=0 // pred_check_branch
    %19 = sbr.rel (0) target = $region21
  $region20: #{roberta_lm_head.1} parent=0 // pred_region
    _
  $region21: #{roberta_lm_head.1} parent=0 // pred_fallthru
    _
  %v21 = vld [vmem:[%s0] sm:$0xff]
  %v22 = vld [vmem:[%s0 + $0x8] sm:$0xff]
  %v23 = vpack.c.bf16 %v22, %v21
  %v24 = vld [vmem:[%s1] sm:$0xf]
  %v25 = vld [vmem:[%s1 + $0x4] sm:$0xf]
  %v26 = vld [vmem:[%s1 + $0x8] sm:$0xf]
  %v27 = vld [vmem:[%s1 + $0xc] sm:$0xf]
  %v28 = vld [vmem:[%s2] sm:$0x1]
  %v30 = vlaneseq
  %v31 = vshrl.u32 %v30, 7
  %v32 = vsub.s32 0, %v31
  %v33 = vrot.slane %v28, %v32
  %v39 = vunpack.c.l.b16 %v24
  %v40 = vunpack.c.l.b16 %v25
  %v41 = vunpack.c.l.b16 %v26
  %v42 = vunpack.c.l.b16 %v27
  %v43 = vpack.c.b16 %v40, %v39
  %v44 = vpack.c.b16 %v42, %v41
  %vm47 = vcmask 261120
  %v49 = vsel %vm47, %v23, 0
  %51 = vmatprep.subr.bf16.mxu0 0
  %52 = vmatpush1.bf16.msra.mxu0 %v43
  %53 = vmatprep.subr.bf16.mxu0 0
  %54 = vmatpush1.bf16.msra.mxu0 %v44
  %55 = vmatprep.subr.bf16.mxu0 0
  %56 = vmatpush1.bf16.msra.mxu0 0
  %57 = vmatprep.subr.bf16.mxu0 0
  %58 = vmatpush1.bf16.msra.mxu0 0
  %59 = vmatprep.subr.bf16.mxu0 0
  %60 = vmatpush1.bf16.msra.mxu0 0
  %61 = vmatprep.subr.bf16.mxu0 0
  %62 = vmatpush1.bf16.msra.mxu0 0
  %63 = vmatprep.subr.bf16.mxu0 0
  %64 = vmatpush1.bf16.msra.mxu0 0
  %65 = vmatprep.subr.bf16.mxu0 0
  %66 = vmatpush1.bf16.msra.mxu0 0
  %67 = vmatprep.subr.bf16.mxu0 0
  %68 = vmatpush1.bf16.msra.mxu0 0
  %69 = vmatprep.subr.bf16.mxu0 0
  %70 = vmatpush1.bf16.msra.mxu0 0
  %71 = vmatprep.subr.bf16.mxu0 0
  %72 = vmatpush1.bf16.msra.mxu0 0
  %73 = vmatprep.subr.bf16.mxu0 0
  %74 = vmatpush1.bf16.msra.mxu0 0
  %75 = vmatprep.subr.bf16.mxu0 0
  %76 = vmatpush1.bf16.msra.mxu0 0
  %77 = vmatprep.subr.bf16.mxu0 0
  %78 = vmatpush1.bf16.msra.mxu0 0
  %79 = vmatprep.subr.bf16.mxu0 0
  %80 = vmatpush1.bf16.msra.mxu0 0
  %81 = vmatprep.subr.bf16.mxu0 0
  %82 = vmatpush1.bf16.msra.mxu0 0
  %83 = vmatprep.mubr.bf16.mxu0 0
  %84 = vmatmul.mubr.bf16.gmra.mrb[0].mxu0 %v49
  %v85 = vpop.f32.mrb[0].mxu0
  %v86 = vadd.f32 %v33, %v85
  %v87 = vpop.f32.mrb[0].mxu0
  %v88 = vpop.f32.mrb[0].mxu0
  %v89 = vadd.f32 %v33, %v88
  %v90 = vpop.f32.mrb[0].mxu0
  %91 = vdwg.mxu0
  %v92 = vmul.f32 %v86, 0.5
  %v93 = vmul.f32 %v89, 0.5
  %v94 = vmul.f32 %v86, 0.044715
  %v95 = vmul.f32 %v89, 0.044715
  %v96 = vmul.f32 %v94, %v86
  %v97 = vmul.f32 %v95, %v89
  %v98 = vmul.f32 %v96, %v86
  %v99 = vmul.f32 %v97, %v89
  %v100 = vadd.f32 %v86, %v98
  %v101 = vadd.f32 %v89, %v99
  %v102 = vmul.f32 %v100, 0.7978846
  %v103 = vmul.f32 %v101, 0.7978846
  %v104 = vtanh.pop %v102
  %v105 = vtanh.pop %v103
  %v106 = vadd.f32 %v104, 1.0
  %v107 = vadd.f32 %v105, 1.0
  %v108 = vmul.f32 %v92, %v106
  %v109 = vmul.f32 %v93, %v107
  %v110 = vsel %vm47, %v108, 0.0
  %111 = vadd.xlane.f32.xlu0 %v110
  %v112 = vpop.xlane.xlu0 %111
  %v113 = vsel %vm47, %v109, 0.0
  %114 = vadd.xlane.f32.xlu0 %v113
  %v115 = vpop.xlane.xlu0 %114
  %v116 = vrcp.pop 32.0
  %v117 = vmul.f32 %v112, %v116
  %v118 = vmul.f32 %v115, %v116
  %v119 = vsub.f32 %v108, %v117
  %v120 = vsub.f32 %v109, %v118
  %v121 = vmul.f32 %v119, %v119
  %v122 = vmul.f32 %v120, %v120
  %v123 = vsel %vm47, %v121, 0.0
  %124 = vadd.xlane.f32.xlu0 %v123
  %v125 = vpop.xlane.xlu0 %124
  %v126 = vsel %vm47, %v122, 0.0
  %127 = vadd.xlane.f32.xlu0 %v126
  %v128 = vpop.xlane.xlu0 %127
  %v129 = vmul.f32 %v125, %v116
  %v130 = vmul.f32 %v128, %v116
  %v131 = vadd.f32 %v129, 1e-05
  %v132 = vadd.f32 %v130, 1e-05
  %v133 = vrsqrt.pop %v131
  %v134 = vrsqrt.pop %v132
  %v135 = vmul.f32 %v119, %v133
  %v136 = vmul.f32 %v120, %v134
  %v137 = vpack.c.bf16 %v136, %v135
  %v138 = vld [vmem:[%s3] sm:$0xf]
  %v139 = vld [vmem:[%s3 + $0x4] sm:$0xf]
  %v140 = vld [vmem:[%s3 + $0x8] sm:$0xf]
  %v141 = vld [vmem:[%s3 + $0xc] sm:$0xf]
  %v142 = vld [vmem:[%s4] sm:$0x1]
  %v144 = vlaneseq
  %v145 = vshrl.u32 %v144, 7
  %v146 = vsub.s32 0, %v145
  %v147 = vrot.slane %v142, %v146
  %v153 = vunpack.c.l.b16 %v138
  %v154 = vunpack.c.l.b16 %v139
  %v155 = vunpack.c.l.b16 %v140
  %v156 = vunpack.c.l.b16 %v141
  %v157 = vpack.c.b16 %v154, %v153
  %v158 = vpack.c.b16 %v156, %v155
  %v162 = vsel %vm47, %v137, 0
  %164 = vmatprep.subr.bf16.mxu0 0
  %165 = vmatpush1.bf16.msra.mxu0 %v157
  %166 = vmatprep.subr.bf16.mxu0 0
  %167 = vmatpush1.bf16.msra.mxu0 %v158
  %168 = vmatprep.subr.bf16.mxu0 0
  %169 = vmatpush1.bf16.msra.mxu0 0
  %170 = vmatprep.subr.bf16.mxu0 0
  %171 = vmatpush1.bf16.msra.mxu0 0
  %172 = vmatprep.subr.bf16.mxu0 0
  %173 = vmatpush1.bf16.msra.mxu0 0
  %174 = vmatprep.subr.bf16.mxu0 0
  %175 = vmatpush1.bf16.msra.mxu0 0
  %176 = vmatprep.subr.bf16.mxu0 0
  %177 = vmatpush1.bf16.msra.mxu0 0
  %178 = vmatprep.subr.bf16.mxu0 0
  %179 = vmatpush1.bf16.msra.mxu0 0
  %180 = vmatprep.subr.bf16.mxu0 0
  %181 = vmatpush1.bf16.msra.mxu0 0
  %182 = vmatprep.subr.bf16.mxu0 0
  %183 = vmatpush1.bf16.msra.mxu0 0
  %184 = vmatprep.subr.bf16.mxu0 0
  %185 = vmatpush1.bf16.msra.mxu0 0
  %186 = vmatprep.subr.bf16.mxu0 0
  %187 = vmatpush1.bf16.msra.mxu0 0
  %188 = vmatprep.subr.bf16.mxu0 0
  %189 = vmatpush1.bf16.msra.mxu0 0
  %190 = vmatprep.subr.bf16.mxu0 0
  %191 = vmatpush1.bf16.msra.mxu0 0
  %192 = vmatprep.subr.bf16.mxu0 0
  %193 = vmatpush1.bf16.msra.mxu0 0
  %194 = vmatprep.subr.bf16.mxu0 0
  %195 = vmatpush1.bf16.msra.mxu0 0
  %196 = vmatprep.mubr.bf16.mxu0 0
  %197 = vmatmul.mubr.bf16.gmra.mrb[0].mxu0 %v162
  %v198 = vpop.f32.mrb[0].mxu0
  %v199 = vadd.f32 %v147, %v198
  %v200 = vpop.f32.mrb[0].mxu0
  %v201 = vpop.f32.mrb[0].mxu0
  %v202 = vadd.f32 %v147, %v201
  %v203 = vpop.f32.mrb[0].mxu0
  %204 = vdwg.mxu0
  %205 = vst [vmem:[%s5] sm:$0xff] %v199
  %206 = vst [vmem:[%s5 + $0x8] sm:$0xff] %v202
  // Predicated region
  $region22: #{roberta_lm_head.1} parent=0 // pred_check
    _
  $region23: #{roberta_lm_head.1} parent=0 // pred_check_branch
    %208 = sbr.rel (0) target = $region25
  $region24: #{roberta_lm_head.1} parent=0 // pred_region
    _
  $region25: #{roberta_lm_head.1} parent=0 // pred_fallthru
    _
  // Predicated region
  $region26: #{roberta_lm_head.1} parent=0 // pred_check
    _
  $region27: #{roberta_lm_head.1} parent=0 // pred_check_branch
    %210 = sbr.rel (0) target = $region29
  $region28: #{roberta_lm_head.1} parent=0 // pred_region
    _
  $region29: #{roberta_lm_head.1} parent=0 // pred_fallthru
    _

</llo_original>
